<compile_context>
chip_gen: v7x
topology: tpu7x:2x2x1
jax: 0.10.0
libtpu: 0.0.40
codegen_flags: <defaults>
</compile_context>

<pallas_src>
import numpy as np
import jax
import jax.numpy as jnp
from jax.experimental import pallas as pl
from jax.experimental.pallas import tpu as pltpu


def _cdiv(a, b):
    return -(-a // b)


def _round_up(x, m):
    return _cdiv(x, m) * m


def _vmem_capacity_bytes():
    """Physical VMEM per TensorCore; conservative fallback if the query fails."""
    try:
        info = pltpu.get_tpu_info()
        cap = int(getattr(info, "vmem_capacity_bytes", 0) or 0)
        if cap > 0:
            return cap
    except Exception:
        pass
    return 64 << 20  # assume the smallest (v7x-like) VMEM when unknown


# ----------------------------------------------------------------------------
# Pallas kernel: lane-packed scatter via one-hot matmul.
#   x_ref: (TMG, G*K)   s_ref: (G*K, LANE)   o_ref: (TMG, LANE)
# precision=HIGHEST makes the f32 one-hot "copy" bit exact; at contraction
# length G*K (48 for B=8) the exact matmul still has >3x headroom over the HBM
# roofline on v5e/v6e/v7x, so the MXU slot stays effectively free.
# ----------------------------------------------------------------------------
def _t2g_kernel(x_ref, s_ref, o_ref):
    o_ref[...] = jnp.dot(
        x_ref[...],
        s_ref[...],
        preferred_element_type=jnp.float32,
        precision=jax.lax.Precision.HIGHEST,
    ).astype(o_ref.dtype)


def tensor_to_geometric(x, blade_indices, num_blades):
    """JAX/Pallas equivalent of TensorToGeometric.forward.

    x:             float array [..., K] with K == len(blade_indices)
    blade_indices: STATIC (host-known) unique ints of length K
    num_blades:    total number of blades B of the algebra (2^dim)
    returns:       array [..., B] with x scattered into the listed blades.
    """
    bidx = np.asarray(blade_indices).astype(np.int64).ravel()
    K = int(x.shape[-1])
    B = int(num_blades)
    assert K == bidx.shape[0], "inputs last dim must equal len(blade_indices)"
    # A one-hot matmul SUMS duplicate indices while the reference .set keeps
    # the last write, so require uniqueness (true for torchga blade layouts).
    assert len(set(bidx.tolist())) == K, "blade_indices must be unique"
    assert np.all((0 <= bidx) & (bidx < B)), "blade index out of range"
    if x.dtype == jnp.dtype("float64"):
        raise TypeError("float64 is not MXU-supported; cast to float32/bfloat16")
    assert jnp.issubdtype(x.dtype, jnp.floating), "floating-point inputs required"

    lead = x.shape[:-1]
    M = int(np.prod(lead)) if lead else 1
    bidx_dev = jnp.asarray(bidx, dtype=jnp.int32)

    def _jax_scatter(rows2d):  # used for tiny inputs and the <G ragged tail
        z = jnp.zeros((rows2d.shape[0], B), dtype=x.dtype)
        return z.at[:, bidx_dev].set(rows2d)

    # Pack G multivectors per output row so the lane axis is exactly 128 wide
    # (B is a power of two in a geometric algebra, so this always divides).
    if B < 128 and 128 % B == 0:
        G = 128 // B
    else:
        G = 1  # B >= 128 (already a multiple of 128) or odd-B fallback
    LANE = G * B

    x2 = x.reshape(M, K)
    M_main = (M // G) * G          # G-aligned prefix handled by the kernel
    r = M - M_main                 # <G-row tail handled in plain JAX

    if M_main == 0:                # too small for the kernel: pure JAX
        return _jax_scatter(x2).reshape(*lead, B)

    # Static block-diagonal one-hot scatter matrix, built on the host (numpy).
    rows = np.arange(G * K)
    S_np = np.zeros((G * K, LANE), dtype=np.float32)
    S_np[rows, (rows // K) * B + bidx[rows % K]] = 1.0
    S = jnp.asarray(S_np, dtype=x.dtype)

    # ---- generation-aware tile sizing --------------------------------------
    itemsize = jnp.dtype(x.dtype).itemsize
    Mg = M_main // G
    vmem_cap = _vmem_capacity_bytes()
    budget = max(4 << 20, min(vmem_cap // 6, 16 << 20))   # pipeline working set
    vmem_limit = int(min(vmem_cap // 2, 4 * budget))      # scoped VMEM request

    in_lanes = _round_up(G * K, 128)                  # VMEM lane padding of input
    per_row_vmem = 2 * (in_lanes + LANE) * itemsize   # dbl-buffered in+out / group row
    s_vmem = 2 * (G * K) * LANE * itemsize            # constant S (double-buffered)
    tmg_cap = max(8, ((budget - s_vmem) // per_row_vmem) // 8 * 8)
    tmg_cap = min(tmg_cap, 8192)

    pass_bytes = Mg * (G * K + LANE) * itemsize       # HBM traffic of one pass
    if pass_bytes >= (8 << 20):
        min_steps = 4          # deep enough to pipeline & feed both v7x cores
    elif pass_bytes >= (512 << 10):
        min_steps = 2
    else:
        min_steps = 1

    TMG = max(8, min(tmg_cap, _round_up(_cdiv(Mg, min_steps), 8)))
    if TMG >= Mg:
        TMG = Mg               # single full-extent block (full dim => any size ok)
    grid = (_cdiv(Mg, TMG),)   # ragged last row-block is clamped by Pallas

    # Contiguous reshape (free when r == 0; only the narrow K-wide prefix is
    # sliced when the shape is ragged — no full-array pad, no output slice).
    xg = (x2 if r == 0 else x2[:M_main]).reshape(Mg, G * K)

    out_g = pl.pallas_call(
        _t2g_kernel,
        out_shape=jax.ShapeDtypeStruct((Mg, LANE), x.dtype),
        grid_spec=pltpu.PrefetchScalarGridSpec(
            num_scalar_prefetch=0,
            grid=grid,
            in_specs=[
                pl.BlockSpec((TMG, G * K), lambda i: (i, 0)),   # last dim = full dim
                pl.BlockSpec((G * K, LANE), lambda i: (0, 0)),  # constant S
            ],
            out_specs=pl.BlockSpec((TMG, LANE), lambda i: (i, 0)),
        ),
        compiler_params=pltpu.CompilerParams(
            dimension_semantics=("parallel",),
            vmem_limit_bytes=vmem_limit,
        ),
        cost_estimate=pl.CostEstimate(
            flops=int(2 * Mg * (G * K) * LANE),
            transcendentals=0,
            bytes_accessed=int((Mg * (G * K + LANE) + (G * K) * LANE) * itemsize),
        ),
    )(xg, S)

    out2d = out_g.reshape(M_main, B)   # contiguous reshape: free
    if r:
        # TODO(synk): ragged shapes still pay one output-sized concat copy; a
        # fully in-place tail would require giving up the lane-dense output.
        out2d = jnp.concatenate([out2d, _jax_scatter(x2[M_main:])], axis=0)
    return out2d.reshape(*lead, B)


# ----------------------------------------------------------------------------
# Reference (plain JAX) for verification
# ----------------------------------------------------------------------------
def tensor_to_geometric_ref(x, blade_indices, num_blades):
    blade_indices = jnp.asarray(blade_indices, dtype=jnp.int32)
    out = jnp.zeros(x.shape[:-1] + (num_blades,), dtype=x.dtype)
    return out.at[..., blade_indices].set(x)


if __name__ == "__main__":
    # Geometric algebra over metric [1, 1, 1] -> 2^3 = 8 blades.
    metric = [1.0, 1.0, 1.0]
    num_blades = 2 ** len(metric)
    # Map input channels to the grade-1 (vector) blades e1, e2, e3 (static).
    blade_indices = [1, 2, 3]

    key = jax.random.PRNGKey(0)
    k1, k2, k3 = jax.random.split(key, 3)

    # 1) Small, G-aligned case: single grid step, fully copy-free path.
    x_small = jax.random.normal(k1, (2, 64, 3), dtype=jnp.float32)
    out_small = jax.block_until_ready(
        tensor_to_geometric(x_small, blade_indices, num_blades))
    ref_small = tensor_to_geometric_ref(x_small, blade_indices, num_blades)
    np.testing.assert_allclose(np.asarray(out_small), np.asarray(ref_small),
                               rtol=1e-6, atol=1e-6)
    assert out_small.shape == (2, 64, num_blades)

    # 2) Small ragged case: exercises the plain-JAX tail (M = 410, tail = 10).
    x_rag = jax.random.normal(k2, (2, 205, 3), dtype=jnp.float32)
    out_rag = jax.block_until_ready(
        tensor_to_geometric(x_rag, blade_indices, num_blades))
    ref_rag = tensor_to_geometric_ref(x_rag, blade_indices, num_blades)
    np.testing.assert_allclose(np.asarray(out_rag), np.asarray(ref_rag),
                               rtol=1e-6, atol=1e-6)
    assert out_rag.shape == (2, 205, num_blades)

    # 3) Larger case: multi-step "parallel" grid + ragged last row-block + tail.
    x_big = jax.random.normal(k3, (2, 8191, 3), dtype=jnp.float32)
    out_big = jax.block_until_ready(
        tensor_to_geometric(x_big, blade_indices, num_blades))
    ref_big = tensor_to_geometric_ref(x_big, blade_indices, num_blades)
    np.testing.assert_allclose(np.asarray(out_big), np.asarray(ref_big),
                               rtol=1e-6, atol=1e-6)
    assert out_big.shape == (2, 8191, num_blades)

    print("KERNEL_OK")
</pallas_src>

<mosaic_0001>
module attributes {stable_mosaic.version = 11 : i64} {
  func.func @_t2g_kernel(%arg0: i32, %arg1: memref<8x48xf32, #tpu.memory_space<vmem>>, %arg2: memref<48x128xf32, #tpu.memory_space<vmem>>, %arg3: memref<8x128xf32, #tpu.memory_space<vmem>>) attributes {dimension_semantics = [#tpu.dimension_semantics<parallel>], iteration_bounds = array<i64: 1>, scalar_prefetch = 0 : i64, scratch_operands = 0 : i64, tpu.core_type = #tpu.core_type<tc>, window_params = [{transform_indices = @transform_0, window_bounds = array<i64: 8, 48>}, {pipeline_mode = #tpu.pipeline_mode<synchronous>, transform_indices = @transform_1, window_bounds = array<i64: 48, 128>}, {transform_indices = @transform_2, window_bounds = array<i64: 8, 128>}]} {
    %c0 = arith.constant 0 : index
    %c0_0 = arith.constant 0 : index
    %0 = vector.load %arg1[%c0, %c0_0] : memref<8x48xf32, #tpu.memory_space<vmem>>, vector<8x48xf32>
    %c0_1 = arith.constant 0 : index
    %c0_2 = arith.constant 0 : index
    %1 = vector.load %arg2[%c0_1, %c0_2] : memref<48x128xf32, #tpu.memory_space<vmem>>, vector<48x128xf32>
    %cst = arith.constant dense<0.000000e+00> : vector<8x128xf32>
    %2 = tpu.matmul %0, %1, %cst {dimension_numbers = #tpu.dot_dimension_numbers<[1], [0], [0], [1], [0, 0, 1, 1], [], []>, precision = #tpu.contract_precision<fp32>} : vector<8x48xf32>, vector<48x128xf32>, vector<8x128xf32> -> vector<8x128xf32>
    %c0_3 = arith.constant 0 : index
    %c0_4 = arith.constant 0 : index
    %3 = vector.load %arg3[%c0_3, %c0_4] : memref<8x128xf32, #tpu.memory_space<vmem>>, vector<8x128xf32>
    tpu.vector_store %arg3[%c0_3, %c0_4], %2 {strides = array<i32>} : memref<8x128xf32, #tpu.memory_space<vmem>>, vector<8x128xf32>,
    return
  }
  func.func @transform_0(%arg0: i32) -> (i32, i32) {
    %c0_i32 = arith.constant 0 : i32
    %c0_i32_0 = arith.constant 0 : i32
    return %arg0, %c0_i32 : i32, i32
  }
  func.func @transform_1(%arg0: i32) -> (i32, i32) {
    %c0_i32 = arith.constant 0 : i32
    %c0_i32_0 = arith.constant 0 : i32
    %c0_i32_1 = arith.constant 0 : i32
    return %c0_i32, %c0_i32_0 : i32, i32
  }
  func.func @transform_2(%arg0: i32) -> (i32, i32) {
    %c0_i32 = arith.constant 0 : i32
    %c0_i32_0 = arith.constant 0 : i32
    return %arg0, %c0_i32 : i32, i32
  }
}

</mosaic_0001>

<llo_original>
// kernel: tpu_custom_call.1
$region0: #{tpu_custom_call.1}
  #allocation0 [shape = 'u32[]', space=smem, size = 0x4, offset = 0x4, fixed_abs, tag = 'smem constant byte address 0x4 - core index']
  #allocation1 [shape = 'u32[144,128]{1,0:T(1,128)}', space=vmem, size = 0x12000, scoped, tag = 'internal scratch']
  %s0 = inlined_call_operand.hbm [shape: f32[8,48], index: 0, kind: input, shape index: {}]
  %s1 = inlined_call_operand.hbm [shape: f32[48,128], index: 1, kind: input, shape index: {}]
  %s2 = inlined_call_operand.hbm [shape: f32[8,128], index: 2, kind: output, shape index: {}]
  %s3 = sld [smem:[#allocation0]]
  $region26: #{tpu_custom_call.1} parent=0
    _
  %s5 = ssub.s32 1, %s3
  %s6 = scalar_select 0, %s5, %s3
  $region1: #{tpu_custom_call.1} parent=0
    #allocation2 [shape = 'u8[4096]{0}', space=vmem, size = 0x1000, scoped, tag = 'input window, operand 0, single buffered']
    #allocation3 [shape = 's32[1]{0}', space=sflag, size = 0x4, scoped, tag = 'scoped memory for tpu_custom_call.1']
    #allocation4 [shape = 's32[1]{0}', space=sflag, size = 0x4, scoped, tag = 'scoped memory for tpu_custom_call.1']
    #allocation5 [shape = 'u8[24576]{0}', space=vmem, size = 0x6000, scoped, tag = 'input window, operand 1, single buffered']
    #allocation6 [shape = 's32[1]{0}', space=sflag, size = 0x4, scoped, tag = 'scoped memory for tpu_custom_call.1']
    #allocation7 [shape = 'u8[4096]{0}', space=vmem, size = 0x1000, scoped, tag = 'output window, operand 0, single buffered']
    %7 = vsyncpa [#allocation3], 0
    %8 = vsyncpa [#allocation6], 0
    %9 = vsyncpa [#allocation4], 0
    // Predicated region
    $region2: #{tpu_custom_call.1} parent=1 // pred_check
      _
    $region3: #{tpu_custom_call.1} parent=1 // pred_check_branch
      %11 = sbr.rel (0) target = $region5
    $region4: #{tpu_custom_call.1} parent=1 // pred_region
      %s13 = ssub.s32 128, 128
      %14 = vsyncadd [#allocation3], %s13
      %s16 = sshll.u32 [#allocation2], 4
      %s17 = int_to_ptr.vmem [resolvable:$true] %s16
      %19 = dma.hbm_to_vmem [thread:$0]  %s0, 128, %s17, [#allocation3]
    $region5: #{tpu_custom_call.1} parent=1 // pred_fallthru
      _
    // Predicated region
    $region6: #{tpu_custom_call.1} parent=1 // pred_check
      _
    $region7: #{tpu_custom_call.1} parent=1 // pred_check_branch
      %21 = sbr.rel (0) target = $region9
    $region8: #{tpu_custom_call.1} parent=1 // pred_region
      %s23 = ssub.s32 768, 768
      %24 = vsyncadd [#allocation6], %s23
      %s25 = sshll.u32 [#allocation5], 4
      %s26 = int_to_ptr.vmem [resolvable:$true] %s25
      %31 = dma.hbm_to_vmem [thread:$0]  %s1, 768, %s26, [#allocation6], 128, 128, 8
    $region9: #{tpu_custom_call.1} parent=1 // pred_fallthru
      _
    // Predicated region
    $region10: #{tpu_custom_call.1} parent=1 // pred_check
      _
    $region11: #{tpu_custom_call.1} parent=1 // pred_check_branch
      %33 = sbr.rel (0) target = $region13
    $region12: #{tpu_custom_call.1} parent=1 // pred_region
      %34 = dma.done [#allocation3], 128
    $region13: #{tpu_custom_call.1} parent=1 // pred_fallthru
      _
    // Predicated region
    $region14: #{tpu_custom_call.1} parent=1 // pred_check
      _
    $region15: #{tpu_custom_call.1} parent=1 // pred_check_branch
      %36 = sbr.rel (0) target = $region17
    $region16: #{tpu_custom_call.1} parent=1 // pred_region
      %37 = dma.done [#allocation6], 768
    $region17: #{tpu_custom_call.1} parent=1 // pred_fallthru
      _
    %v38 = vld [vmem:[#allocation2] sm:$0xff]
    %v39 = vld [vmem:[#allocation5] sm:$0xff]
    %v40 = vld [vmem:[#allocation5 + $0x8] sm:$0xff]
    %v41 = vld [vmem:[#allocation5 + $0x10] sm:$0xff]
    %v42 = vld [vmem:[#allocation5 + $0x18] sm:$0xff]
    %v43 = vld [vmem:[#allocation5 + $0x20] sm:$0xff]
    %v44 = vld [vmem:[#allocation5 + $0x28] sm:$0xff]
    %vm45 = vcmask 392192
    %v47 = vsel %vm45, %v38, 0
    %49 = vmatprep.subr.mxu0 0.0
    %v50 = vand.u32 %v39, 4294901760
    %51 = vmatpush1.msra.mxu0 %v50
    %52 = vmatprep.subr.mxu0 0.0
    %v53 = vand.u32 %v40, 4294901760
    %54 = vmatpush1.msra.mxu0 %v53
    %55 = vmatprep.subr.mxu0 0.0
    %v56 = vand.u32 %v41, 4294901760
    %57 = vmatpush1.msra.mxu0 %v56
    %58 = vmatprep.subr.mxu0 0.0
    %v59 = vand.u32 %v42, 4294901760
    %60 = vmatpush1.msra.mxu0 %v59
    %61 = vmatprep.subr.mxu0 0.0
    %v62 = vand.u32 %v43, 4294901760
    %63 = vmatpush1.msra.mxu0 %v62
    %64 = vmatprep.subr.mxu0 0.0
    %v65 = vand.u32 %v44, 4294901760
    %66 = vmatpush1.msra.mxu0 %v65
    %67 = vmatprep.subr.mxu0 0.0
    %68 = vmatpush1.msra.mxu0 0.0
    %69 = vmatprep.subr.mxu0 0.0
    %70 = vmatpush1.msra.mxu0 0.0
    %71 = vmatprep.subr.mxu0 0.0
    %72 = vmatpush1.msra.mxu0 0.0
    %73 = vmatprep.subr.mxu0 0.0
    %74 = vmatpush1.msra.mxu0 0.0
    %75 = vmatprep.subr.mxu0 0.0
    %76 = vmatpush1.msra.mxu0 0.0
    %77 = vmatprep.subr.mxu0 0.0
    %78 = vmatpush1.msra.mxu0 0.0
    %79 = vmatprep.subr.mxu0 0.0
    %80 = vmatpush1.msra.mxu0 0.0
    %81 = vmatprep.subr.mxu0 0.0
    %82 = vmatpush1.msra.mxu0 0.0
    %83 = vmatprep.subr.mxu0 0.0
    %84 = vmatpush1.msra.mxu0 0.0
    %85 = vmatprep.subr.mxu0 0.0
    %86 = vmatpush1.msra.mxu0 0.0
    %87 = vmatprep.subr.mxu0 0.0
    %88 = vmatpush1.msra.mxu0 0.0
    %89 = vmatprep.subr.mxu0 0.0
    %90 = vmatpush1.msra.mxu0 0.0
    %91 = vmatprep.subr.mxu0 0.0
    %92 = vmatpush1.msra.mxu0 0.0
    %93 = vmatprep.subr.mxu0 0.0
    %94 = vmatpush1.msra.mxu0 0.0
    %95 = vmatprep.subr.mxu0 0.0
    %96 = vmatpush1.msra.mxu0 0.0
    %97 = vmatprep.subr.mxu0 0.0
    %98 = vmatpush1.msra.mxu0 0.0
    %99 = vmatprep.subr.mxu0 0.0
    %100 = vmatpush1.msra.mxu0 0.0
    %101 = vmatprep.subr.mxu0 0.0
    %102 = vmatpush1.msra.mxu0 0.0
    %103 = vmatprep.subr.mxu0 0.0
    %104 = vmatpush1.msra.mxu0 0.0
    %105 = vmatprep.subr.mxu0 0.0
    %106 = vmatpush1.msra.mxu0 0.0
    %107 = vmatprep.subr.mxu0 0.0
    %108 = vmatpush1.msra.mxu0 0.0
    %109 = vmatprep.subr.mxu0 0.0
    %110 = vmatpush1.msra.mxu0 0.0
    %111 = vmatprep.subr.mxu0 0.0
    %112 = vmatpush1.msra.mxu0 0.0
    %113 = vmatprep.subr.mxu0 0.0
    %114 = vmatpush1.msra.mxu0 0.0
    %115 = vmatprep.subr.mxu0 0.0
    %116 = vmatpush1.msra.mxu0 0.0
    %117 = vmatprep.subr.mxu0 0.0
    %118 = vmatpush1.msra.mxu0 0.0
    %119 = vmatprep.mubr.f32.mxu0 0.0
    %v120 = vand.u32 %v47, 4294901760
    %v121 = vsub.f32 %v47, %v120
    %v122 = vand.u32 %v121, 4294901760
    %v123 = vsub.f32 %v121, %v122
    %v124 = vand.u32 %v123, 4294901760
    %125 = vmatmul.mubr.f32.gmra.mrb[0].mxu0 %v124
    %v126 = vpop.f32.mrb[0].mxu0
    %v127 = vadd.f32 0.0, %v126
    %v128 = vpop.f32.mrb[0].mxu0
    %129 = vdwg.mxu0
    %130 = vmatprep.subr.mxu0 0.0
    %v131 = vand.u32 %v39, 4294901760
    %v132 = vsub.f32 %v39, %v131
    %v133 = vand.u32 %v132, 4294901760
    %v134 = vsub.f32 %v132, %v133
    %v135 = vand.u32 %v134, 4294901760
    %136 = vmatpush1.msra.mxu0 %v135
    %137 = vmatprep.subr.mxu0 0.0
    %v138 = vand.u32 %v40, 4294901760
    %v139 = vsub.f32 %v40, %v138
    %v140 = vand.u32 %v139, 4294901760
    %v141 = vsub.f32 %v139, %v140
    %v142 = vand.u32 %v141, 4294901760
    %143 = vmatpush1.msra.mxu0 %v142
    %144 = vmatprep.subr.mxu0 0.0
    %v145 = vand.u32 %v41, 4294901760
    %v146 = vsub.f32 %v41, %v145
    %v147 = vand.u32 %v146, 4294901760
    %v148 = vsub.f32 %v146, %v147
    %v149 = vand.u32 %v148, 4294901760
    %150 = vmatpush1.msra.mxu0 %v149
    %151 = vmatprep.subr.mxu0 0.0
    %v152 = vand.u32 %v42, 4294901760
    %v153 = vsub.f32 %v42, %v152
    %v154 = vand.u32 %v153, 4294901760
    %v155 = vsub.f32 %v153, %v154
    %v156 = vand.u32 %v155, 4294901760
    %157 = vmatpush1.msra.mxu0 %v156
    %158 = vmatprep.subr.mxu0 0.0
    %v159 = vand.u32 %v43, 4294901760
    %v160 = vsub.f32 %v43, %v159
    %v161 = vand.u32 %v160, 4294901760
    %v162 = vsub.f32 %v160, %v161
    %v163 = vand.u32 %v162, 4294901760
    %164 = vmatpush1.msra.mxu0 %v163
    %165 = vmatprep.subr.mxu0 0.0
    %v166 = vand.u32 %v44, 4294901760
    %v167 = vsub.f32 %v44, %v166
    %v168 = vand.u32 %v167, 4294901760
    %v169 = vsub.f32 %v167, %v168
    %v170 = vand.u32 %v169, 4294901760
    %171 = vmatpush1.msra.mxu0 %v170
    %172 = vmatprep.subr.mxu0 0.0
    %173 = vmatpush1.msra.mxu0 0.0
    %174 = vmatprep.subr.mxu0 0.0
    %175 = vmatpush1.msra.mxu0 0.0
    %176 = vmatprep.subr.mxu0 0.0
    %177 = vmatpush1.msra.mxu0 0.0
    %178 = vmatprep.subr.mxu0 0.0
    %179 = vmatpush1.msra.mxu0 0.0
    %180 = vmatprep.subr.mxu0 0.0
    %181 = vmatpush1.msra.mxu0 0.0
    %182 = vmatprep.subr.mxu0 0.0
    %183 = vmatpush1.msra.mxu0 0.0
    %184 = vmatprep.subr.mxu0 0.0
    %185 = vmatpush1.msra.mxu0 0.0
    %186 = vmatprep.subr.mxu0 0.0
    %187 = vmatpush1.msra.mxu0 0.0
    %188 = vmatprep.subr.mxu0 0.0
    %189 = vmatpush1.msra.mxu0 0.0
    %190 = vmatprep.subr.mxu0 0.0
    %191 = vmatpush1.msra.mxu0 0.0
    %192 = vmatprep.subr.mxu0 0.0
    %193 = vmatpush1.msra.mxu0 0.0
    %194 = vmatprep.subr.mxu0 0.0
    %195 = vmatpush1.msra.mxu0 0.0
    %196 = vmatprep.subr.mxu0 0.0
    %197 = vmatpush1.msra.mxu0 0.0
    %198 = vmatprep.subr.mxu0 0.0
    %199 = vmatpush1.msra.mxu0 0.0
    %200 = vmatprep.subr.mxu0 0.0
    %201 = vmatpush1.msra.mxu0 0.0
    %202 = vmatprep.subr.mxu0 0.0
    %203 = vmatpush1.msra.mxu0 0.0
    %204 = vmatprep.subr.mxu0 0.0
    %205 = vmatpush1.msra.mxu0 0.0
    %206 = vmatprep.subr.mxu0 0.0
    %207 = vmatpush1.msra.mxu0 0.0
    %208 = vmatprep.subr.mxu0 0.0
    %209 = vmatpush1.msra.mxu0 0.0
    %210 = vmatprep.subr.mxu0 0.0
    %211 = vmatpush1.msra.mxu0 0.0
    %212 = vmatprep.subr.mxu0 0.0
    %213 = vmatpush1.msra.mxu0 0.0
    %214 = vmatprep.subr.mxu0 0.0
    %215 = vmatpush1.msra.mxu0 0.0
    %216 = vmatprep.subr.mxu0 0.0
    %217 = vmatpush1.msra.mxu0 0.0
    %218 = vmatprep.subr.mxu0 0.0
    %219 = vmatpush1.msra.mxu0 0.0
    %220 = vmatprep.subr.mxu0 0.0
    %221 = vmatpush1.msra.mxu0 0.0
    %222 = vmatprep.subr.mxu0 0.0
    %223 = vmatpush1.msra.mxu0 0.0
    %224 = vmatprep.mubr.f32.mxu0 0.0
    %v225 = vand.u32 %v47, 4294901760
    %226 = vmatmul.mubr.f32.gmra.mrb[0].mxu0 %v225
    %v227 = vpop.f32.mrb[0].mxu0
    %v228 = vadd.f32 %v127, %v227
    %v229 = vpop.f32.mrb[0].mxu0
    %230 = vdwg.mxu0
    %231 = vmatprep.subr.mxu0 0.0
    %v232 = vand.u32 %v39, 4294901760
    %v233 = vsub.f32 %v39, %v232
    %234 = vmatpush1.msra.mxu0 %v233
    %235 = vmatprep.subr.mxu0 0.0
    %v236 = vand.u32 %v40, 4294901760
    %v237 = vsub.f32 %v40, %v236
    %238 = vmatpush1.msra.mxu0 %v237
    %239 = vmatprep.subr.mxu0 0.0
    %v240 = vand.u32 %v41, 4294901760
    %v241 = vsub.f32 %v41, %v240
    %242 = vmatpush1.msra.mxu0 %v241
    %243 = vmatprep.subr.mxu0 0.0
    %v244 = vand.u32 %v42, 4294901760
    %v245 = vsub.f32 %v42, %v244
    %246 = vmatpush1.msra.mxu0 %v245
    %247 = vmatprep.subr.mxu0 0.0
    %v248 = vand.u32 %v43, 4294901760
    %v249 = vsub.f32 %v43, %v248
    %250 = vmatpush1.msra.mxu0 %v249
    %251 = vmatprep.subr.mxu0 0.0
    %v252 = vand.u32 %v44, 4294901760
    %v253 = vsub.f32 %v44, %v252
    %254 = vmatpush1.msra.mxu0 %v253
    %255 = vmatprep.subr.mxu0 0.0
    %256 = vmatpush1.msra.mxu0 0.0
    %257 = vmatprep.subr.mxu0 0.0
    %258 = vmatpush1.msra.mxu0 0.0
    %259 = vmatprep.subr.mxu0 0.0
    %260 = vmatpush1.msra.mxu0 0.0
    %261 = vmatprep.subr.mxu0 0.0
    %262 = vmatpush1.msra.mxu0 0.0
    %263 = vmatprep.subr.mxu0 0.0
    %264 = vmatpush1.msra.mxu0 0.0
    %265 = vmatprep.subr.mxu0 0.0
    %266 = vmatpush1.msra.mxu0 0.0
    %267 = vmatprep.subr.mxu0 0.0
    %268 = vmatpush1.msra.mxu0 0.0
    %269 = vmatprep.subr.mxu0 0.0
    %270 = vmatpush1.msra.mxu0 0.0
    %271 = vmatprep.subr.mxu0 0.0
    %272 = vmatpush1.msra.mxu0 0.0
    %273 = vmatprep.subr.mxu0 0.0
    %274 = vmatpush1.msra.mxu0 0.0
    %275 = vmatprep.subr.mxu0 0.0
    %276 = vmatpush1.msra.mxu0 0.0
    %277 = vmatprep.subr.mxu0 0.0
    %278 = vmatpush1.msra.mxu0 0.0
    %279 = vmatprep.subr.mxu0 0.0
    %280 = vmatpush1.msra.mxu0 0.0
    %281 = vmatprep.subr.mxu0 0.0
    %282 = vmatpush1.msra.mxu0 0.0
    %283 = vmatprep.subr.mxu0 0.0
    %284 = vmatpush1.msra.mxu0 0.0
    %285 = vmatprep.subr.mxu0 0.0
    %286 = vmatpush1.msra.mxu0 0.0
    %287 = vmatprep.subr.mxu0 0.0
    %288 = vmatpush1.msra.mxu0 0.0
    %289 = vmatprep.subr.mxu0 0.0
    %290 = vmatpush1.msra.mxu0 0.0
    %291 = vmatprep.subr.mxu0 0.0
    %292 = vmatpush1.msra.mxu0 0.0
    %293 = vmatprep.subr.mxu0 0.0
    %294 = vmatpush1.msra.mxu0 0.0
    %295 = vmatprep.subr.mxu0 0.0
    %296 = vmatpush1.msra.mxu0 0.0
    %297 = vmatprep.subr.mxu0 0.0
    %298 = vmatpush1.msra.mxu0 0.0
    %299 = vmatprep.subr.mxu0 0.0
    %300 = vmatpush1.msra.mxu0 0.0
    %301 = vmatprep.subr.mxu0 0.0
    %302 = vmatpush1.msra.mxu0 0.0
    %303 = vmatprep.subr.mxu0 0.0
    %304 = vmatpush1.msra.mxu0 0.0
    %305 = vmatprep.subr.mxu0 0.0
    %306 = vmatpush1.msra.mxu0 0.0
    %307 = vmatprep.mubr.f32.mxu0 0.0
    %v308 = vand.u32 %v47, 4294901760
    %v309 = vsub.f32 %v47, %v308
    %310 = vmatmul.mubr.f32.gmra.mrb[0].mxu0 %v309
    %v311 = vpop.f32.mrb[0].mxu0
    %v312 = vadd.f32 %v228, %v311
    %v313 = vpop.f32.mrb[0].mxu0
    %314 = vdwg.mxu0
    %315 = vmatprep.subr.mxu0 0.0
    %v316 = vand.u32 %v39, 4294901760
    %317 = vmatpush1.msra.mxu0 %v316
    %318 = vmatprep.subr.mxu0 0.0
    %v319 = vand.u32 %v40, 4294901760
    %320 = vmatpush1.msra.mxu0 %v319
    %321 = vmatprep.subr.mxu0 0.0
    %v322 = vand.u32 %v41, 4294901760
    %323 = vmatpush1.msra.mxu0 %v322
    %324 = vmatprep.subr.mxu0 0.0
    %v325 = vand.u32 %v42, 4294901760
    %326 = vmatpush1.msra.mxu0 %v325
    %327 = vmatprep.subr.mxu0 0.0
    %v328 = vand.u32 %v43, 4294901760
    %329 = vmatpush1.msra.mxu0 %v328
    %330 = vmatprep.subr.mxu0 0.0
    %v331 = vand.u32 %v44, 4294901760
    %332 = vmatpush1.msra.mxu0 %v331
    %333 = vmatprep.subr.mxu0 0.0
    %334 = vmatpush1.msra.mxu0 0.0
    %335 = vmatprep.subr.mxu0 0.0
    %336 = vmatpush1.msra.mxu0 0.0
    %337 = vmatprep.subr.mxu0 0.0
    %338 = vmatpush1.msra.mxu0 0.0
    %339 = vmatprep.subr.mxu0 0.0
    %340 = vmatpush1.msra.mxu0 0.0
    %341 = vmatprep.subr.mxu0 0.0
    %342 = vmatpush1.msra.mxu0 0.0
    %343 = vmatprep.subr.mxu0 0.0
    %344 = vmatpush1.msra.mxu0 0.0
    %345 = vmatprep.subr.mxu0 0.0
    %346 = vmatpush1.msra.mxu0 0.0
    %347 = vmatprep.subr.mxu0 0.0
    %348 = vmatpush1.msra.mxu0 0.0
    %349 = vmatprep.subr.mxu0 0.0
    %350 = vmatpush1.msra.mxu0 0.0
    %351 = vmatprep.subr.mxu0 0.0
    %352 = vmatpush1.msra.mxu0 0.0
    %353 = vmatprep.subr.mxu0 0.0
    %354 = vmatpush1.msra.mxu0 0.0
    %355 = vmatprep.subr.mxu0 0.0
    %356 = vmatpush1.msra.mxu0 0.0
    %357 = vmatprep.subr.mxu0 0.0
    %358 = vmatpush1.msra.mxu0 0.0
    %359 = vmatprep.subr.mxu0 0.0
    %360 = vmatpush1.msra.mxu0 0.0
    %361 = vmatprep.subr.mxu0 0.0
    %362 = vmatpush1.msra.mxu0 0.0
    %363 = vmatprep.subr.mxu0 0.0
    %364 = vmatpush1.msra.mxu0 0.0
    %365 = vmatprep.subr.mxu0 0.0
    %366 = vmatpush1.msra.mxu0 0.0
    %367 = vmatprep.subr.mxu0 0.0
    %368 = vmatpush1.msra.mxu0 0.0
    %369 = vmatprep.subr.mxu0 0.0
    %370 = vmatpush1.msra.mxu0 0.0
    %371 = vmatprep.subr.mxu0 0.0
    %372 = vmatpush1.msra.mxu0 0.0
    %373 = vmatprep.subr.mxu0 0.0
    %374 = vmatpush1.msra.mxu0 0.0
    %375 = vmatprep.subr.mxu0 0.0
    %376 = vmatpush1.msra.mxu0 0.0
    %377 = vmatprep.subr.mxu0 0.0
    %378 = vmatpush1.msra.mxu0 0.0
    %379 = vmatprep.subr.mxu0 0.0
    %380 = vmatpush1.msra.mxu0 0.0
    %381 = vmatprep.subr.mxu0 0.0
    %382 = vmatpush1.msra.mxu0 0.0
    %383 = vmatprep.subr.mxu0 0.0
    %384 = vmatpush1.msra.mxu0 0.0
    %385 = vmatprep.mubr.f32.mxu0 0.0
    %v386 = vand.u32 %v47, 4294901760
    %v387 = vsub.f32 %v47, %v386
    %v388 = vand.u32 %v387, 4294901760
    %389 = vmatmul.mubr.f32.gmra.mrb[0].mxu0 %v388
    %v390 = vpop.f32.mrb[0].mxu0
    %v391 = vadd.f32 %v312, %v390
    %v392 = vpop.f32.mrb[0].mxu0
    %393 = vdwg.mxu0
    %394 = vmatprep.subr.mxu0 0.0
    %v395 = vand.u32 %v39, 4294901760
    %v396 = vsub.f32 %v39, %v395
    %v397 = vand.u32 %v396, 4294901760
    %398 = vmatpush1.msra.mxu0 %v397
    %399 = vmatprep.subr.mxu0 0.0
    %v400 = vand.u32 %v40, 4294901760
    %v401 = vsub.f32 %v40, %v400
    %v402 = vand.u32 %v401, 4294901760
    %403 = vmatpush1.msra.mxu0 %v402
    %404 = vmatprep.subr.mxu0 0.0
    %v405 = vand.u32 %v41, 4294901760
    %v406 = vsub.f32 %v41, %v405
    %v407 = vand.u32 %v406, 4294901760
    %408 = vmatpush1.msra.mxu0 %v407
    %409 = vmatprep.subr.mxu0 0.0
    %v410 = vand.u32 %v42, 4294901760
    %v411 = vsub.f32 %v42, %v410
    %v412 = vand.u32 %v411, 4294901760
    %413 = vmatpush1.msra.mxu0 %v412
    %414 = vmatprep.subr.mxu0 0.0
    %v415 = vand.u32 %v43, 4294901760
    %v416 = vsub.f32 %v43, %v415
    %v417 = vand.u32 %v416, 4294901760
    %418 = vmatpush1.msra.mxu0 %v417
    %419 = vmatprep.subr.mxu0 0.0
    %v420 = vand.u32 %v44, 4294901760
    %v421 = vsub.f32 %v44, %v420
    %v422 = vand.u32 %v421, 4294901760
    %423 = vmatpush1.msra.mxu0 %v422
    %424 = vmatprep.subr.mxu0 0.0
    %425 = vmatpush1.msra.mxu0 0.0
    %426 = vmatprep.subr.mxu0 0.0
    %427 = vmatpush1.msra.mxu0 0.0
    %428 = vmatprep.subr.mxu0 0.0
    %429 = vmatpush1.msra.mxu0 0.0
    %430 = vmatprep.subr.mxu0 0.0
    %431 = vmatpush1.msra.mxu0 0.0
    %432 = vmatprep.subr.mxu0 0.0
    %433 = vmatpush1.msra.mxu0 0.0
    %434 = vmatprep.subr.mxu0 0.0
    %435 = vmatpush1.msra.mxu0 0.0
    %436 = vmatprep.subr.mxu0 0.0
    %437 = vmatpush1.msra.mxu0 0.0
    %438 = vmatprep.subr.mxu0 0.0
    %439 = vmatpush1.msra.mxu0 0.0
    %440 = vmatprep.subr.mxu0 0.0
    %441 = vmatpush1.msra.mxu0 0.0
    %442 = vmatprep.subr.mxu0 0.0
    %443 = vmatpush1.msra.mxu0 0.0
    %444 = vmatprep.subr.mxu0 0.0
    %445 = vmatpush1.msra.mxu0 0.0
    %446 = vmatprep.subr.mxu0 0.0
    %447 = vmatpush1.msra.mxu0 0.0
    %448 = vmatprep.subr.mxu0 0.0
    %449 = vmatpush1.msra.mxu0 0.0
    %450 = vmatprep.subr.mxu0 0.0
    %451 = vmatpush1.msra.mxu0 0.0
    %452 = vmatprep.subr.mxu0 0.0
    %453 = vmatpush1.msra.mxu0 0.0
    %454 = vmatprep.subr.mxu0 0.0
    %455 = vmatpush1.msra.mxu0 0.0
    %456 = vmatprep.subr.mxu0 0.0
    %457 = vmatpush1.msra.mxu0 0.0
    %458 = vmatprep.subr.mxu0 0.0
    %459 = vmatpush1.msra.mxu0 0.0
    %460 = vmatprep.subr.mxu0 0.0
    %461 = vmatpush1.msra.mxu0 0.0
    %462 = vmatprep.subr.mxu0 0.0
    %463 = vmatpush1.msra.mxu0 0.0
    %464 = vmatprep.subr.mxu0 0.0
    %465 = vmatpush1.msra.mxu0 0.0
    %466 = vmatprep.subr.mxu0 0.0
    %467 = vmatpush1.msra.mxu0 0.0
    %468 = vmatprep.subr.mxu0 0.0
    %469 = vmatpush1.msra.mxu0 0.0
    %470 = vmatprep.subr.mxu0 0.0
    %471 = vmatpush1.msra.mxu0 0.0
    %472 = vmatprep.subr.mxu0 0.0
    %473 = vmatpush1.msra.mxu0 0.0
    %474 = vmatprep.subr.mxu0 0.0
    %475 = vmatpush1.msra.mxu0 0.0
    %476 = vmatprep.mubr.f32.mxu0 0.0
    %v477 = vand.u32 %v47, 4294901760
    %478 = vmatmul.mubr.f32.gmra.mrb[0].mxu0 %v477
    %v479 = vpop.f32.mrb[0].mxu0
    %v480 = vadd.f32 %v391, %v479
    %v481 = vpop.f32.mrb[0].mxu0
    %482 = vdwg.mxu0
    %483 = vmatprep.subr.mxu0 0.0
    %v484 = vand.u32 %v39, 4294901760
    %485 = vmatpush1.msra.mxu0 %v484
    %486 = vmatprep.subr.mxu0 0.0
    %v487 = vand.u32 %v40, 4294901760
    %488 = vmatpush1.msra.mxu0 %v487
    %489 = vmatprep.subr.mxu0 0.0
    %v490 = vand.u32 %v41, 4294901760
    %491 = vmatpush1.msra.mxu0 %v490
    %492 = vmatprep.subr.mxu0 0.0
    %v493 = vand.u32 %v42, 4294901760
    %494 = vmatpush1.msra.mxu0 %v493
    %495 = vmatprep.subr.mxu0 0.0
    %v496 = vand.u32 %v43, 4294901760
    %497 = vmatpush1.msra.mxu0 %v496
    %498 = vmatprep.subr.mxu0 0.0
    %v499 = vand.u32 %v44, 4294901760
    %500 = vmatpush1.msra.mxu0 %v499
    %501 = vmatprep.subr.mxu0 0.0
    %502 = vmatpush1.msra.mxu0 0.0
    %503 = vmatprep.subr.mxu0 0.0
    %504 = vmatpush1.msra.mxu0 0.0
    %505 = vmatprep.subr.mxu0 0.0
    %506 = vmatpush1.msra.mxu0 0.0
    %507 = vmatprep.subr.mxu0 0.0
    %508 = vmatpush1.msra.mxu0 0.0
    %509 = vmatprep.subr.mxu0 0.0
    %510 = vmatpush1.msra.mxu0 0.0
    %511 = vmatprep.subr.mxu0 0.0
    %512 = vmatpush1.msra.mxu0 0.0
    %513 = vmatprep.subr.mxu0 0.0
    %514 = vmatpush1.msra.mxu0 0.0
    %515 = vmatprep.subr.mxu0 0.0
    %516 = vmatpush1.msra.mxu0 0.0
    %517 = vmatprep.subr.mxu0 0.0
    %518 = vmatpush1.msra.mxu0 0.0
    %519 = vmatprep.subr.mxu0 0.0
    %520 = vmatpush1.msra.mxu0 0.0
    %521 = vmatprep.subr.mxu0 0.0
    %522 = vmatpush1.msra.mxu0 0.0
    %523 = vmatprep.subr.mxu0 0.0
    %524 = vmatpush1.msra.mxu0 0.0
    %525 = vmatprep.subr.mxu0 0.0
    %526 = vmatpush1.msra.mxu0 0.0
    %527 = vmatprep.subr.mxu0 0.0
    %528 = vmatpush1.msra.mxu0 0.0
    %529 = vmatprep.subr.mxu0 0.0
    %530 = vmatpush1.msra.mxu0 0.0
    %531 = vmatprep.subr.mxu0 0.0
    %532 = vmatpush1.msra.mxu0 0.0
    %533 = vmatprep.subr.mxu0 0.0
    %534 = vmatpush1.msra.mxu0 0.0
    %535 = vmatprep.subr.mxu0 0.0
    %536 = vmatpush1.msra.mxu0 0.0
    %537 = vmatprep.subr.mxu0 0.0
    %538 = vmatpush1.msra.mxu0 0.0
    %539 = vmatprep.subr.mxu0 0.0
    %540 = vmatpush1.msra.mxu0 0.0
    %541 = vmatprep.subr.mxu0 0.0
    %542 = vmatpush1.msra.mxu0 0.0
    %543 = vmatprep.subr.mxu0 0.0
    %544 = vmatpush1.msra.mxu0 0.0
    %545 = vmatprep.subr.mxu0 0.0
    %546 = vmatpush1.msra.mxu0 0.0
    %547 = vmatprep.subr.mxu0 0.0
    %548 = vmatpush1.msra.mxu0 0.0
    %549 = vmatprep.subr.mxu0 0.0
    %550 = vmatpush1.msra.mxu0 0.0
    %551 = vmatprep.subr.mxu0 0.0
    %552 = vmatpush1.msra.mxu0 0.0
    %553 = vmatprep.mubr.f32.mxu0 0.0
    %v554 = vand.u32 %v47, 4294901760
    %555 = vmatmul.mubr.f32.gmra.mrb[0].mxu0 %v554
    %v556 = vpop.f32.mrb[0].mxu0
    %v557 = vadd.f32 %v480, %v556
    %v558 = vpop.f32.mrb[0].mxu0
    %559 = vdwg.mxu0
    %560 = vst [vmem:[#allocation7] sm:$0xff] %v557
    // Predicated region
    $region18: #{tpu_custom_call.1} parent=1 // pred_check
      _
    $region19: #{tpu_custom_call.1} parent=1 // pred_check_branch
      %562 = sbr.rel (0) target = $region21
    $region20: #{tpu_custom_call.1} parent=1 // pred_region
      %s564 = ssub.s32 128, 128
      %565 = vsyncadd [#allocation4], %s564
      %s567 = sshll.u32 [#allocation7], 4
      %s568 = int_to_ptr.vmem [resolvable:$true] %s567
      %570 = dma.vmem_to_hbm [thread:$0]  %s568, 128, %s2, [#allocation4]
    $region21: #{tpu_custom_call.1} parent=1 // pred_fallthru
      _
    // Predicated region
    $region22: #{tpu_custom_call.1} parent=1 // pred_check
      _
    $region23: #{tpu_custom_call.1} parent=1 // pred_check_branch
      %572 = sbr.rel (0) target = $region25
    $region24: #{tpu_custom_call.1} parent=1 // pred_region
      %573 = dma.done [#allocation4], 128
    $region25: #{tpu_custom_call.1} parent=1 // pred_fallthru
      _
    %574 = vsyncpa [#allocation3], 1
    %575 = vsyncpa [#allocation6], 1
    %576 = vsyncpa [#allocation4], 1

</llo_original>
